<compile_context>
chip_gen: v7x
topology: tpu7x:2x2x1
jax: 0.10.0
libtpu: 0.0.40
codegen_flags: <defaults>
</compile_context>

<pallas_src>
import functools

import jax
import jax.numpy as jnp
from jax.experimental import pallas as pl
from jax.experimental.pallas import tpu as pltpu


def _round_up(x, m):
    return ((x + m - 1) // m) * m


def _cdiv(a, b):
    return (a + b - 1) // b


_MAX_TB = 2048  # per-tile batch rows; tiny weights -> well under scoped VMEM on v5e/v6e/v7x


def _make_kernel(n_hidden, fuse_returns):
    """Fused MLP forward for one (TB,)-batch tile. Optionally fuses `returns - value`."""

    def kernel(*refs):
        out_ref = refs[-1]
        obs_ref = refs[0]
        if fuse_returns:
            ret_ref = refs[1]
            prm = refs[2:-1]
        else:
            prm = refs[1:-1]

        # Hidden layers: bf16 MXU matmuls (f32 accumulate) + f32 bias/ReLU on the VPU.
        # (f32 activations kept so the same kernel is correct on v5e, which has no bf16 VPU;
        #  on v6e/v7x a bf16-activation path would shave a little more VPU/vreg cost.)
        h = obs_ref[...]                                       # (TB, obs_dim)
        for l in range(n_hidden):
            w = prm[2 * l][...]                                # (in, out) bf16, VMEM-resident
            b = prm[2 * l + 1][...]                            # (1, out)  f32, VMEM-resident
            z = jnp.dot(h.astype(w.dtype), w, preferred_element_type=jnp.float32)
            h = jnp.maximum(z + b, 0.0)                        # (TB, out) f32

        # Output layer (Linear -> 1) on the MXU, lane-dense result:
        #   wv is (8, H_pad) with the real weights in row 0 and zeros elsewhere; contracting
        #   both last dims gives (8, TB) directly — no (H_pad, TB) transpose, no VPU
        #   broadcast-multiply, no 128-deep cross-sublane reduce.
        wv = prm[2 * n_hidden][...]                            # (8, H_pad) bf16
        b_out = prm[2 * n_hidden + 1][0]                       # scalar bias from SMEM
        val8 = jax.lax.dot_general(
            wv, h.astype(wv.dtype),
            dimension_numbers=(((1,), (1,)), ((), ())),
            preferred_element_type=jnp.float32)                # (8, TB); rows 1..7 are zero
        val = val8[0:1, :] + b_out                             # (1, TB) lane-dense row

        if fuse_returns:
            out_ref[...] = ret_ref[...] - val                  # fused advantage = returns - V
        else:
            out_ref[...] = val

    return kernel


def pack_baseline_params(params):
    """Pre-pack raw [(w, b), ...] params into the kernel layout (bf16 weights, zero-padded
    last hidden width, (8, H_pad) output-weight row-block, scalar SMEM output bias).

    Call this ONCE per parameter update — not per forward call — so the cast/pad prologue
    disappears from the forward hot path."""
    assert len(params) >= 2, "need at least one hidden layer plus the output layer"
    n_hidden = len(params) - 1
    h_last = params[-2][0].shape[1]
    h_last_pad = _round_up(h_last, 128)

    packed = []
    for li, (w, b) in enumerate(params[:-1]):
        w = jnp.asarray(w, jnp.float32)
        b = jnp.asarray(b, jnp.float32).reshape(1, -1)
        if li == n_hidden - 1 and h_last_pad != h_last:
            # Lane-align the last hidden width; padded columns are exactly 0 after ReLU
            # (zero weight cols + zero bias) and contribute 0 to the output contraction.
            w = jnp.pad(w, ((0, 0), (0, h_last_pad - h_last)))
            b = jnp.pad(b, ((0, 0), (0, h_last_pad - h_last)))
        packed += [w.astype(jnp.bfloat16), b]                  # bf16 weights: MXU-native

    w_out, b_out = params[-1]
    w_row = jnp.asarray(w_out, jnp.float32).reshape(1, -1)     # (1, h_last)
    if h_last_pad != h_last:
        w_row = jnp.pad(w_row, ((0, 0), (0, h_last_pad - h_last)))
    w_row8 = jnp.pad(w_row, ((0, 7), (0, 0))).astype(jnp.bfloat16)  # (8, H_pad), rows 1..7 = 0
    b_out = jnp.asarray(b_out, jnp.float32).reshape(1)
    packed += [w_row8, b_out]
    return tuple(packed)


def _choose_tile(B, block_batch):
    if block_batch is not None:
        assert block_batch % 128 == 0
        return block_batch
    B128 = _round_up(max(B, 1), 128)
    if B128 <= 128:
        return 128
    # Per-grid-step overhead (~0.35us) dominates at these tiny layer sizes -> big tiles,
    # but always leave >= 2 steps so v7x's two TensorCores both get work under "parallel".
    n_tiles = max(_cdiv(B128, _MAX_TB), 2)
    return min(_MAX_TB, _round_up(_cdiv(B128, n_tiles), 128))


def _mlp_pallas(obs, packed, returns=None, block_batch=None):
    """Runs the fused MLP on pre-packed params. Returns V(obs) of shape (B,), or
    returns - V(obs) if `returns` is given (fused advantage)."""
    assert obs.ndim == 2
    n_hidden = (len(packed) - 2) // 2
    B, obs_dim = obs.shape
    fuse = returns is not None

    if obs.dtype not in (jnp.float32, jnp.bfloat16):
        obs = obs.astype(jnp.float32)  # stream obs as provided (bf16 halves the HBM stream)

    TB = _choose_tile(B, block_batch)
    B_pad = _round_up(B, TB)
    grid = (B_pad // TB,)
    if B_pad != B:
        obs = jnp.pad(obs, ((0, B_pad - B), (0, 0)))

    const = lambda i: (0, 0)  # weights/biases: same block every step -> DMA'd once, resident

    # Streamed inputs: obs tiles (and fused returns tiles).
    in_arrays = [obs]
    in_specs = [pl.BlockSpec((TB, obs_dim), lambda i: (i, 0))]
    if fuse:
        r = returns.astype(jnp.float32).reshape(-1)
        if B_pad != B:
            r = jnp.pad(r, (0, B_pad - B))
        in_arrays.append(r.reshape(1, B_pad))
        in_specs.append(pl.BlockSpec((1, TB), lambda i: (0, i)))

    # VMEM-resident packed parameters + scalar output bias in SMEM.
    for a in packed[:-1]:
        in_arrays.append(a)
        in_specs.append(pl.BlockSpec(a.shape, const))
    in_arrays.append(packed[-1])
    in_specs.append(pl.BlockSpec(memory_space=pltpu.MemorySpace.SMEM))

    flops = 2 * B_pad * sum(int(packed[2 * l].shape[0]) * int(packed[2 * l].shape[1])
                            for l in range(n_hidden))
    flops += 2 * B_pad * int(packed[-2].shape[0]) * int(packed[-2].shape[1])
    bytes_accessed = (int(obs.size) * obs.dtype.itemsize
                      + B_pad * 4 * (2 if fuse else 1)          # output (+ fused returns)
                      + sum(int(a.size) * a.dtype.itemsize for a in packed))

    out = pl.pallas_call(
        _make_kernel(n_hidden, fuse),
        grid=grid,
        in_specs=in_specs,
        out_specs=pl.BlockSpec((1, TB), lambda i: (0, i)),      # lane-dense output row
        out_shape=jax.ShapeDtypeStruct((1, B_pad), jnp.float32),
        compiler_params=pltpu.CompilerParams(
            dimension_semantics=("parallel",),                  # megacore / dual-TC on v7x
            vmem_limit_bytes=32 * 1024 * 1024,                  # safe on v5e/v6e/v7x
        ),
        cost_estimate=pl.CostEstimate(
            flops=flops, transcendentals=0, bytes_accessed=bytes_accessed),
    )(*in_arrays)

    return out.reshape(B_pad)[:B]


@functools.partial(jax.jit, static_argnames=("block_batch",))
def baseline_forward(obs, packed_params, block_batch=None):
    """V(obs): matches `self.network(obs).squeeze()` -> shape (B,). `packed_params` comes
    from pack_baseline_params (pre-packed once per parameter update)."""
    values = _mlp_pallas(obs, packed_params, returns=None, block_batch=block_batch)
    assert values.ndim == 1
    return values


@functools.partial(jax.jit, static_argnames=("block_batch",))
def calculate_advantage(returns, obs, packed_params, block_batch=None):
    """advantages = returns - V(obs), fused into the same kernel launch."""
    return _mlp_pallas(obs, packed_params, returns=returns, block_batch=block_batch)


def init_baseline_params(key, obs_dim, n_layers, layer_size):
    """Deterministic init mirroring build_mlp(obs_dim, 1, n_layers, layer_size)."""
    params = []
    in_dim = obs_dim
    dims = [layer_size] * n_layers + [1]
    for out_dim in dims:
        key, kw, kb = jax.random.split(key, 3)
        bound = 1.0 / jnp.sqrt(jnp.float32(in_dim))   # PyTorch nn.Linear default range
        w = jax.random.uniform(kw, (in_dim, out_dim), jnp.float32, -bound, bound)
        b = jax.random.uniform(kb, (out_dim,), jnp.float32, -bound, bound)
        params.append((w, b))
        in_dim = out_dim
    return params


def _reference_values(obs, params):
    """Pure-JAX reference mirroring the kernel numerics (bf16-rounded matmul inputs,
    f32 accumulation, f32 bias/ReLU). NOTE: the bf16 matmul inputs are a deliberate,
    tolerance-checked deviation from the pure-f32 PyTorch Baseline."""
    h = obs.astype(jnp.float32)
    for (w, b) in params[:-1]:
        hb = h.astype(jnp.bfloat16).astype(jnp.float32)
        wb = w.astype(jnp.bfloat16).astype(jnp.float32)
        z = jnp.dot(hb, wb, precision=jax.lax.Precision.HIGHEST) + b.reshape(1, -1)
        h = jnp.maximum(z, 0.0)
    w_out, b_out = params[-1]
    hb = h.astype(jnp.bfloat16).astype(jnp.float32)
    wb = w_out.astype(jnp.float32).astype(jnp.bfloat16).astype(jnp.float32)
    z = jnp.dot(hb, wb, precision=jax.lax.Precision.HIGHEST)
    return (z + b_out.astype(jnp.float32)).reshape(-1)


if __name__ == "__main__":
    # Small config consistent with the module: obs_dim from env.observation_space,
    # n_layers hidden layers of layer_size, scalar value output.
    batch = 8
    obs_dim = 32
    n_layers = 2
    layer_size = 32

    key = jax.random.PRNGKey(0)
    key, k_obs, k_ret = jax.random.split(key, 3)
    obs = jax.random.normal(k_obs, (batch, obs_dim), dtype=jnp.float32)
    returns = jax.random.normal(k_ret, (batch,), dtype=jnp.float32)
    params = init_baseline_params(key, obs_dim, n_layers, layer_size)

    # Pack once per parameter update (hoisted out of the forward hot path).
    packed = pack_baseline_params(params)

    values = jax.block_until_ready(baseline_forward(obs, packed))
    assert values.shape == (batch,)
    ref = _reference_values(obs, params)
    assert jnp.allclose(values, ref, atol=2e-4, rtol=2e-4), (values, ref)

    adv = jax.block_until_ready(calculate_advantage(returns, obs, packed))
    assert adv.shape == (batch,)
    assert jnp.allclose(adv, returns - ref, atol=2e-4, rtol=2e-4)

    # Multi-tile grid (default tiling yields >= 2 steps here: TB=256, grid=(2,)) + padding.
    obs2 = jax.random.normal(jax.random.PRNGKey(1), (300, obs_dim), dtype=jnp.float32)
    ref2 = _reference_values(obs2, params)
    vals2 = jax.block_until_ready(baseline_forward(obs2, packed))
    assert vals2.shape == (300,)
    assert jnp.allclose(vals2, ref2, atol=2e-4, rtol=2e-4)

    # Explicit block_batch override path (grid=(3,)).
    vals3 = jax.block_until_ready(baseline_forward(obs2, packed, block_batch=128))
    assert jnp.allclose(vals3, ref2, atol=2e-4, rtol=2e-4)

    # bf16 obs streaming path: halves the dominant HBM stream; numerics unchanged because
    # the kernel rounds obs to bf16 before the first matmul anyway.
    vals_bf16 = jax.block_until_ready(baseline_forward(obs2.astype(jnp.bfloat16), packed))
    assert jnp.allclose(vals_bf16, ref2, atol=2e-4, rtol=2e-4)

    # TODO(synk): update_baseline (Adam step / MSE backward) is training glue outside the
    # forward hot path and is not implemented as a Pallas kernel.
    print("KERNEL_OK")
</pallas_src>

<mosaic_0001>
module attributes {stable_mosaic.version = 11 : i64} {
  func.func @kernel(%arg0: i32, %arg1: memref<128x32xf32, #tpu.memory_space<vmem>>, %arg2: memref<32x32xbf16, #tpu.memory_space<vmem>>, %arg3: memref<1x32xf32, #tpu.memory_space<vmem>>, %arg4: memref<32x128xbf16, #tpu.memory_space<vmem>>, %arg5: memref<1x128xf32, #tpu.memory_space<vmem>>, %arg6: memref<8x128xbf16, #tpu.memory_space<vmem>>, %arg7: memref<1xf32, #tpu.memory_space<smem>>, %arg8: memref<1x128xf32, #tpu.memory_space<vmem>>) attributes {dimension_semantics = [#tpu.dimension_semantics<parallel>], iteration_bounds = array<i64: 1>, scalar_prefetch = 0 : i64, scratch_operands = 0 : i64, tpu.core_type = #tpu.core_type<tc>, window_params = [{transform_indices = @transform_0, window_bounds = array<i64: 128, 32>}, {pipeline_mode = #tpu.pipeline_mode<synchronous>, transform_indices = @transform_1, window_bounds = array<i64: 32, 32>}, {pipeline_mode = #tpu.pipeline_mode<synchronous>, transform_indices = @transform_2, window_bounds = array<i64: 1, 32>}, {pipeline_mode = #tpu.pipeline_mode<synchronous>, transform_indices = @transform_3, window_bounds = array<i64: 32, 128>}, {pipeline_mode = #tpu.pipeline_mode<synchronous>, transform_indices = @transform_4, window_bounds = array<i64: 1, 128>}, {pipeline_mode = #tpu.pipeline_mode<synchronous>, transform_indices = @transform_5, window_bounds = array<i64: 8, 128>}, {transform_indices = @transform_6, window_bounds = array<i64: 1>}, {transform_indices = @transform_7, window_bounds = array<i64: 1, 128>}]} {
    %c0 = arith.constant 0 : index
    %c0_0 = arith.constant 0 : index
    %0 = vector.load %arg1[%c0, %c0_0] : memref<128x32xf32, #tpu.memory_space<vmem>>, vector<128x32xf32>
    %c0_1 = arith.constant 0 : index
    %c0_2 = arith.constant 0 : index
    %1 = vector.load %arg2[%c0_1, %c0_2] : memref<32x32xbf16, #tpu.memory_space<vmem>>, vector<32x32xbf16>
    %c0_3 = arith.constant 0 : index
    %c0_4 = arith.constant 0 : index
    %2 = vector.load %arg3[%c0_3, %c0_4] : memref<1x32xf32, #tpu.memory_space<vmem>>, vector<1x32xf32>
    %3 = arith.truncf %0 : vector<128x32xf32> to vector<128x32xbf16>
    %cst = arith.constant dense<0.000000e+00> : vector<128x32xf32>
    %4 = tpu.matmul %3, %1, %cst {dimension_numbers = #tpu.dot_dimension_numbers<[1], [0], [0], [1], [0, 0, 1, 1], [], []>} : vector<128x32xbf16>, vector<32x32xbf16>, vector<128x32xf32> -> vector<128x32xf32>
    %5 = vector.broadcast %2 : vector<1x32xf32> to vector<128x32xf32>
    %6 = arith.addf %4, %5 : vector<128x32xf32>
    %cst_5 = arith.constant 0.000000e+00 : f32
    %7 = vector.broadcast %cst_5 : f32 to vector<128x32xf32>
    %8 = arith.maximumf %6, %7 : vector<128x32xf32>
    %c0_6 = arith.constant 0 : index
    %c0_7 = arith.constant 0 : index
    %9 = vector.load %arg4[%c0_6, %c0_7] : memref<32x128xbf16, #tpu.memory_space<vmem>>, vector<32x128xbf16>
    %c0_8 = arith.constant 0 : index
    %c0_9 = arith.constant 0 : index
    %10 = vector.load %arg5[%c0_8, %c0_9] : memref<1x128xf32, #tpu.memory_space<vmem>>, vector<1x128xf32>
    %11 = arith.truncf %8 : vector<128x32xf32> to vector<128x32xbf16>
    %cst_10 = arith.constant dense<0.000000e+00> : vector<128x128xf32>
    %12 = tpu.matmul %11, %9, %cst_10 {dimension_numbers = #tpu.dot_dimension_numbers<[1], [0], [0], [1], [0, 0, 1, 1], [], []>} : vector<128x32xbf16>, vector<32x128xbf16>, vector<128x128xf32> -> vector<128x128xf32>
    %13 = vector.broadcast %10 : vector<1x128xf32> to vector<128x128xf32>
    %14 = arith.addf %12, %13 : vector<128x128xf32>
    %cst_11 = arith.constant 0.000000e+00 : f32
    %15 = vector.broadcast %cst_11 : f32 to vector<128x128xf32>
    %16 = arith.maximumf %14, %15 : vector<128x128xf32>
    %c0_12 = arith.constant 0 : index
    %c0_13 = arith.constant 0 : index
    %17 = vector.load %arg6[%c0_12, %c0_13] : memref<8x128xbf16, #tpu.memory_space<vmem>>, vector<8x128xbf16>
    %c0_14 = arith.constant 0 : index
    %18 = memref.load %arg7[%c0_14] : memref<1xf32, #tpu.memory_space<smem>>
    %19 = arith.truncf %16 : vector<128x128xf32> to vector<128x128xbf16>
    %cst_15 = arith.constant dense<0.000000e+00> : vector<8x128xf32>
    %20 = tpu.matmul %17, %19, %cst_15 {dimension_numbers = #tpu.dot_dimension_numbers<[1], [1], [0], [0], [0, 0, 1, 0], [], []>} : vector<8x128xbf16>, vector<128x128xbf16>, vector<8x128xf32> -> vector<8x128xf32>
    %21 = vector.extract_strided_slice %20 {offsets = [0, 0], sizes = [1, 128], strides = [1, 1]} : vector<8x128xf32> to vector<1x128xf32>
    %22 = vector.broadcast %18 : f32 to vector<1x128xf32>
    %23 = arith.addf %21, %22 : vector<1x128xf32>
    %c0_16 = arith.constant 0 : index
    %c0_17 = arith.constant 0 : index
    %24 = vector.load %arg8[%c0_16, %c0_17] : memref<1x128xf32, #tpu.memory_space<vmem>>, vector<1x128xf32>
    tpu.vector_store %arg8[%c0_16, %c0_17], %23 {strides = array<i32>} : memref<1x128xf32, #tpu.memory_space<vmem>>, vector<1x128xf32>,
    return
  }
  func.func @transform_0(%arg0: i32) -> (i32, i32) {
    %c0_i32 = arith.constant 0 : i32
    %c0_i32_0 = arith.constant 0 : i32
    return %arg0, %c0_i32 : i32, i32
  }
  func.func @transform_1(%arg0: i32) -> (i32, i32) {
    %c0_i32 = arith.constant 0 : i32
    %c0_i32_0 = arith.constant 0 : i32
    %c0_i32_1 = arith.constant 0 : i32
    return %c0_i32, %c0_i32_0 : i32, i32
  }
  func.func @transform_2(%arg0: i32) -> (i32, i32) {
    %c0_i32 = arith.constant 0 : i32
    %c0_i32_0 = arith.constant 0 : i32
    %c0_i32_1 = arith.constant 0 : i32
    return %c0_i32, %c0_i32_0 : i32, i32
  }
  func.func @transform_3(%arg0: i32) -> (i32, i32) {
    %c0_i32 = arith.constant 0 : i32
    %c0_i32_0 = arith.constant 0 : i32
    %c0_i32_1 = arith.constant 0 : i32
    return %c0_i32, %c0_i32_0 : i32, i32
  }
  func.func @transform_4(%arg0: i32) -> (i32, i32) {
    %c0_i32 = arith.constant 0 : i32
    %c0_i32_0 = arith.constant 0 : i32
    %c0_i32_1 = arith.constant 0 : i32
    return %c0_i32, %c0_i32_0 : i32, i32
  }
  func.func @transform_5(%arg0: i32) -> (i32, i32) {
    %c0_i32 = arith.constant 0 : i32
    %c0_i32_0 = arith.constant 0 : i32
    %c0_i32_1 = arith.constant 0 : i32
    return %c0_i32, %c0_i32_0 : i32, i32
  }
  func.func @transform_6(%arg0: i32) -> i32 {
    %c0_i32 = arith.constant 0 : i32
    %c0_i32_0 = arith.constant 0 : i32
    return %c0_i32 : i32
  }
  func.func @transform_7(%arg0: i32) -> (i32, i32) {
    %c0_i32 = arith.constant 0 : i32
    %c0_i32_0 = arith.constant 0 : i32
    return %c0_i32, %arg0 : i32, i32
  }
}

</mosaic_0001>

<llo_original>
// kernel: baseline_forward.1
$region0: #{baseline_forward.1}
  #allocation0 [shape = 'u32[]', space=smem, size = 0x4, offset = 0x4, fixed_abs, tag = 'smem constant byte address 0x4 - core index']
  #allocation1 [shape = 'u32[144,128]{1,0:T(1,128)}', space=vmem, size = 0x12000, scoped, tag = 'internal scratch']
  #allocation2 [shape = 'f32[1]{0:T(128)S(6)}', space=smem, size = 0x200, scoped, tag = 'scoped memory for baseline_forward.1']
  %s0 = inlined_call_operand.vmem [shape: f32[128,32], index: 0, kind: input, shape index: {}]
  %s1 = inlined_call_operand.vmem [shape: bf16[32,32], index: 1, kind: input, shape index: {}]
  %s2 = inlined_call_operand.vmem [shape: f32[1,32], index: 2, kind: input, shape index: {}]
  %s3 = inlined_call_operand.vmem [shape: bf16[32,128], index: 3, kind: input, shape index: {}]
  %s4 = inlined_call_operand.vmem [shape: f32[1,128], index: 4, kind: input, shape index: {}]
  %s5 = inlined_call_operand.vmem [shape: bf16[8,128], index: 5, kind: input, shape index: {}]
  %s6 = inlined_call_operand.<no memory space> [shape: f32[1], index: 6, kind: input, shape index: {}]
  %s7 = inlined_call_operand.vmem [shape: f32[1,128], index: 7, kind: output, shape index: {}]
  %s8 = sld [smem:[#allocation0]]
  $region38: #{baseline_forward.1} parent=0
    _
  %s10 = ssub.s32 1, %s8
  %s11 = scalar_select 0, %s10, %s8
  %12 = sst [smem:[#allocation2]] %s6
  // Predicated region
  $region2: #{baseline_forward.1} parent=0 // pred_check
    _
  $region3: #{baseline_forward.1} parent=0 // pred_check_branch
    %14 = sbr.rel (0) target = $region5
  $region4: #{baseline_forward.1} parent=0 // pred_region
    _
  $region5: #{baseline_forward.1} parent=0 // pred_fallthru
    _
  // Predicated region
  $region6: #{baseline_forward.1} parent=0 // pred_check
    _
  $region7: #{baseline_forward.1} parent=0 // pred_check_branch
    %16 = sbr.rel (0) target = $region9
  $region8: #{baseline_forward.1} parent=0 // pred_region
    _
  $region9: #{baseline_forward.1} parent=0 // pred_fallthru
    _
  // Predicated region
  $region10: #{baseline_forward.1} parent=0 // pred_check
    _
  $region11: #{baseline_forward.1} parent=0 // pred_check_branch
    %18 = sbr.rel (0) target = $region13
  $region12: #{baseline_forward.1} parent=0 // pred_region
    _
  $region13: #{baseline_forward.1} parent=0 // pred_fallthru
    _
  // Predicated region
  $region14: #{baseline_forward.1} parent=0 // pred_check
    _
  $region15: #{baseline_forward.1} parent=0 // pred_check_branch
    %20 = sbr.rel (0) target = $region17
  $region16: #{baseline_forward.1} parent=0 // pred_region
    _
  $region17: #{baseline_forward.1} parent=0 // pred_fallthru
    _
  // Predicated region
  $region18: #{baseline_forward.1} parent=0 // pred_check
    _
  $region19: #{baseline_forward.1} parent=0 // pred_check_branch
    %22 = sbr.rel (0) target = $region21
  $region20: #{baseline_forward.1} parent=0 // pred_region
    _
  $region21: #{baseline_forward.1} parent=0 // pred_fallthru
    _
  // Predicated region
  $region22: #{baseline_forward.1} parent=0 // pred_check
    _
  $region23: #{baseline_forward.1} parent=0 // pred_check_branch
    %24 = sbr.rel (0) target = $region25
  $region24: #{baseline_forward.1} parent=0 // pred_region
    _
  $region25: #{baseline_forward.1} parent=0 // pred_fallthru
    _
  // Predicated region
  $region26: #{baseline_forward.1} parent=0 // pred_check
    _
  $region27: #{baseline_forward.1} parent=0 // pred_check_branch
    %26 = sbr.rel (0) target = $region29
  $region28: #{baseline_forward.1} parent=0 // pred_region
    _
  $region29: #{baseline_forward.1} parent=0 // pred_fallthru
    _
  %v28 = vld [vmem:[%s0] sm:$0xff]
  %v29 = vld [vmem:[%s0 + $0x8] sm:$0xff]
  %v30 = vld [vmem:[%s0 + $0x10] sm:$0xff]
  %v31 = vld [vmem:[%s0 + $0x18] sm:$0xff]
  %v32 = vld [vmem:[%s0 + $0x20] sm:$0xff]
  %v33 = vld [vmem:[%s0 + $0x28] sm:$0xff]
  %v34 = vld [vmem:[%s0 + $0x30] sm:$0xff]
  %v35 = vld [vmem:[%s0 + $0x38] sm:$0xff]
  %v36 = vld [vmem:[%s0 + $0x40] sm:$0xff]
  %v37 = vld [vmem:[%s0 + $0x48] sm:$0xff]
  %v38 = vld [vmem:[%s0 + $0x50] sm:$0xff]
  %v39 = vld [vmem:[%s0 + $0x58] sm:$0xff]
  %v40 = vld [vmem:[%s0 + $0x60] sm:$0xff]
  %v41 = vld [vmem:[%s0 + $0x68] sm:$0xff]
  %v42 = vld [vmem:[%s0 + $0x70] sm:$0xff]
  %v43 = vld [vmem:[%s0 + $0x78] sm:$0xff]
  %v44 = vld [vmem:[%s1] sm:$0xf]
  %v45 = vld [vmem:[%s1 + $0x4] sm:$0xf]
  %v46 = vld [vmem:[%s1 + $0x8] sm:$0xf]
  %v47 = vld [vmem:[%s1 + $0xc] sm:$0xf]
  %v48 = vld [vmem:[%s2] sm:$0x1]
  %v49 = vpack.c.bf16 %v29, %v28
  %v50 = vpack.c.bf16 %v31, %v30
  %v51 = vpack.c.bf16 %v33, %v32
  %v52 = vpack.c.bf16 %v35, %v34
  %v53 = vpack.c.bf16 %v37, %v36
  %v54 = vpack.c.bf16 %v39, %v38
  %v55 = vpack.c.bf16 %v41, %v40
  %v56 = vpack.c.bf16 %v43, %v42
  %v58 = vlaneseq
  %v59 = vshrl.u32 %v58, 7
  %v60 = vsub.s32 0, %v59
  %v61 = vrot.slane %v48, %v60
  %v67 = vunpack.c.l.b16 %v44
  %v68 = vunpack.c.l.b16 %v45
  %v69 = vunpack.c.l.b16 %v46
  %v70 = vunpack.c.l.b16 %v47
  %v71 = vpack.c.b16 %v68, %v67
  %v72 = vpack.c.b16 %v70, %v69
  %vm75 = vcmask 261120
  %v77 = vsel %vm75, %v49, 0
  %v80 = vsel %vm75, %v50, 0
  %v83 = vsel %vm75, %v51, 0
  %v86 = vsel %vm75, %v52, 0
  %v89 = vsel %vm75, %v53, 0
  %v92 = vsel %vm75, %v54, 0
  %v95 = vsel %vm75, %v55, 0
  %v98 = vsel %vm75, %v56, 0
  %100 = vmatprep.subr.bf16.mxu0 0
  %101 = vmatpush1.bf16.msra.mxu0 %v71
  %102 = vmatprep.subr.bf16.mxu0 0
  %103 = vmatpush1.bf16.msra.mxu0 %v72
  %104 = vmatprep.subr.bf16.mxu0 0
  %105 = vmatpush1.bf16.msra.mxu0 0
  %106 = vmatprep.subr.bf16.mxu0 0
  %107 = vmatpush1.bf16.msra.mxu0 0
  %108 = vmatprep.subr.bf16.mxu0 0
  %109 = vmatpush1.bf16.msra.mxu0 0
  %110 = vmatprep.subr.bf16.mxu0 0
  %111 = vmatpush1.bf16.msra.mxu0 0
  %112 = vmatprep.subr.bf16.mxu0 0
  %113 = vmatpush1.bf16.msra.mxu0 0
  %114 = vmatprep.subr.bf16.mxu0 0
  %115 = vmatpush1.bf16.msra.mxu0 0
  %116 = vmatprep.subr.bf16.mxu0 0
  %117 = vmatpush1.bf16.msra.mxu0 0
  %118 = vmatprep.subr.bf16.mxu0 0
  %119 = vmatpush1.bf16.msra.mxu0 0
  %120 = vmatprep.subr.bf16.mxu0 0
  %121 = vmatpush1.bf16.msra.mxu0 0
  %122 = vmatprep.subr.bf16.mxu0 0
  %123 = vmatpush1.bf16.msra.mxu0 0
  %124 = vmatprep.subr.bf16.mxu0 0
  %125 = vmatpush1.bf16.msra.mxu0 0
  %126 = vmatprep.subr.bf16.mxu0 0
  %127 = vmatpush1.bf16.msra.mxu0 0
  %128 = vmatprep.subr.bf16.mxu0 0
  %129 = vmatpush1.bf16.msra.mxu0 0
  %130 = vmatprep.subr.bf16.mxu0 0
  %131 = vmatpush1.bf16.msra.mxu0 0
  %132 = vmatprep.mubr.bf16.mxu0 0
  %133 = vmatmul.mubr.bf16.gmra.mrb[0].mxu0 %v77
  %v134 = vpop.f32.mrb[0].mxu0
  %v135 = vadd.f32 %v61, %v134
  %v136 = vpop.f32.mrb[0].mxu0
  %v137 = vpop.f32.mrb[0].mxu0
  %v138 = vadd.f32 %v61, %v137
  %v139 = vpop.f32.mrb[0].mxu0
  %140 = vmatprep.mubr.bf16.mxu0 0
  %141 = vmatmul.mubr.bf16.gmra.mrb[0].mxu0 %v80
  %v142 = vpop.f32.mrb[0].mxu0
  %v143 = vadd.f32 %v61, %v142
  %v144 = vpop.f32.mrb[0].mxu0
  %v145 = vpop.f32.mrb[0].mxu0
  %v146 = vadd.f32 %v61, %v145
  %v147 = vpop.f32.mrb[0].mxu0
  %148 = vmatprep.mubr.bf16.mxu0 0
  %149 = vmatmul.mubr.bf16.gmra.mrb[0].mxu0 %v83
  %v150 = vpop.f32.mrb[0].mxu0
  %v151 = vadd.f32 %v61, %v150
  %v152 = vpop.f32.mrb[0].mxu0
  %v153 = vpop.f32.mrb[0].mxu0
  %v154 = vadd.f32 %v61, %v153
  %v155 = vpop.f32.mrb[0].mxu0
  %156 = vmatprep.mubr.bf16.mxu0 0
  %157 = vmatmul.mubr.bf16.gmra.mrb[0].mxu0 %v86
  %v158 = vpop.f32.mrb[0].mxu0
  %v159 = vadd.f32 %v61, %v158
  %v160 = vpop.f32.mrb[0].mxu0
  %v161 = vpop.f32.mrb[0].mxu0
  %v162 = vadd.f32 %v61, %v161
  %v163 = vpop.f32.mrb[0].mxu0
  %164 = vmatprep.mubr.bf16.mxu0 0
  %165 = vmatmul.mubr.bf16.gmra.mrb[0].mxu0 %v89
  %v166 = vpop.f32.mrb[0].mxu0
  %v167 = vadd.f32 %v61, %v166
  %v168 = vpop.f32.mrb[0].mxu0
  %v169 = vpop.f32.mrb[0].mxu0
  %v170 = vadd.f32 %v61, %v169
  %v171 = vpop.f32.mrb[0].mxu0
  %172 = vmatprep.mubr.bf16.mxu0 0
  %173 = vmatmul.mubr.bf16.gmra.mrb[0].mxu0 %v92
  %v174 = vpop.f32.mrb[0].mxu0
  %v175 = vadd.f32 %v61, %v174
  %v176 = vpop.f32.mrb[0].mxu0
  %v177 = vpop.f32.mrb[0].mxu0
  %v178 = vadd.f32 %v61, %v177
  %v179 = vpop.f32.mrb[0].mxu0
  %180 = vmatprep.mubr.bf16.mxu0 0
  %181 = vmatmul.mubr.bf16.gmra.mrb[0].mxu0 %v95
  %v182 = vpop.f32.mrb[0].mxu0
  %v183 = vadd.f32 %v61, %v182
  %v184 = vpop.f32.mrb[0].mxu0
  %v185 = vpop.f32.mrb[0].mxu0
  %v186 = vadd.f32 %v61, %v185
  %v187 = vpop.f32.mrb[0].mxu0
  %188 = vmatprep.mubr.bf16.mxu0 0
  %189 = vmatmul.mubr.bf16.gmra.mrb[0].mxu0 %v98
  %v190 = vpop.f32.mrb[0].mxu0
  %v191 = vadd.f32 %v61, %v190
  %v192 = vpop.f32.mrb[0].mxu0
  %v193 = vpop.f32.mrb[0].mxu0
  %v194 = vadd.f32 %v61, %v193
  %v195 = vpop.f32.mrb[0].mxu0
  %196 = vdwg.mxu0
  %v197 = vmax.f32 %v135, 0.0
  %v198 = vmax.f32 %v138, 0.0
  %v199 = vmax.f32 %v143, 0.0
  %v200 = vmax.f32 %v146, 0.0
  %v201 = vmax.f32 %v151, 0.0
  %v202 = vmax.f32 %v154, 0.0
  %v203 = vmax.f32 %v159, 0.0
  %v204 = vmax.f32 %v162, 0.0
  %v205 = vmax.f32 %v167, 0.0
  %v206 = vmax.f32 %v170, 0.0
  %v207 = vmax.f32 %v175, 0.0
  %v208 = vmax.f32 %v178, 0.0
  %v209 = vmax.f32 %v183, 0.0
  %v210 = vmax.f32 %v186, 0.0
  %v211 = vmax.f32 %v191, 0.0
  %v212 = vmax.f32 %v194, 0.0
  %v213 = vld [vmem:[%s3] sm:$0xf]
  %v214 = vld [vmem:[%s3 + $0x4] sm:$0xf]
  %v215 = vld [vmem:[%s3 + $0x8] sm:$0xf]
  %v216 = vld [vmem:[%s3 + $0xc] sm:$0xf]
  %v217 = vld [vmem:[%s4] sm:$0x1]
  %v218 = vpack.c.bf16 %v198, %v197
  %v219 = vpack.c.bf16 %v200, %v199
  %v220 = vpack.c.bf16 %v202, %v201
  %v221 = vpack.c.bf16 %v204, %v203
  %v222 = vpack.c.bf16 %v206, %v205
  %v223 = vpack.c.bf16 %v208, %v207
  %v224 = vpack.c.bf16 %v210, %v209
  %v225 = vpack.c.bf16 %v212, %v211
  %v227 = vlaneseq
  %v228 = vshrl.u32 %v227, 7
  %v229 = vsub.s32 0, %v228
  %v230 = vrot.slane %v217, %v229
  %v236 = vunpack.c.l.b16 %v213
  %v237 = vunpack.c.l.b16 %v214
  %v238 = vunpack.c.l.b16 %v215
  %v239 = vunpack.c.l.b16 %v216
  %v240 = vpack.c.b16 %v237, %v236
  %v241 = vpack.c.b16 %v239, %v238
  %v245 = vsel %vm75, %v218, 0
  %v248 = vsel %vm75, %v219, 0
  %v251 = vsel %vm75, %v220, 0
  %v254 = vsel %vm75, %v221, 0
  %v257 = vsel %vm75, %v222, 0
  %v260 = vsel %vm75, %v223, 0
  %v263 = vsel %vm75, %v224, 0
  %v266 = vsel %vm75, %v225, 0
  %268 = vmatprep.subr.bf16.mxu0 0
  %269 = vmatpush1.bf16.msra.mxu0 %v240
  %270 = vmatprep.subr.bf16.mxu0 0
  %271 = vmatpush1.bf16.msra.mxu0 %v241
  %272 = vmatprep.subr.bf16.mxu0 0
  %273 = vmatpush1.bf16.msra.mxu0 0
  %274 = vmatprep.subr.bf16.mxu0 0
  %275 = vmatpush1.bf16.msra.mxu0 0
  %276 = vmatprep.subr.bf16.mxu0 0
  %277 = vmatpush1.bf16.msra.mxu0 0
  %278 = vmatprep.subr.bf16.mxu0 0
  %279 = vmatpush1.bf16.msra.mxu0 0
  %280 = vmatprep.subr.bf16.mxu0 0
  %281 = vmatpush1.bf16.msra.mxu0 0
  %282 = vmatprep.subr.bf16.mxu0 0
  %283 = vmatpush1.bf16.msra.mxu0 0
  %284 = vmatprep.subr.bf16.mxu0 0
  %285 = vmatpush1.bf16.msra.mxu0 0
  %286 = vmatprep.subr.bf16.mxu0 0
  %287 = vmatpush1.bf16.msra.mxu0 0
  %288 = vmatprep.subr.bf16.mxu0 0
  %289 = vmatpush1.bf16.msra.mxu0 0
  %290 = vmatprep.subr.bf16.mxu0 0
  %291 = vmatpush1.bf16.msra.mxu0 0
  %292 = vmatprep.subr.bf16.mxu0 0
  %293 = vmatpush1.bf16.msra.mxu0 0
  %294 = vmatprep.subr.bf16.mxu0 0
  %295 = vmatpush1.bf16.msra.mxu0 0
  %296 = vmatprep.subr.bf16.mxu0 0
  %297 = vmatpush1.bf16.msra.mxu0 0
  %298 = vmatprep.subr.bf16.mxu0 0
  %299 = vmatpush1.bf16.msra.mxu0 0
  %300 = vmatprep.mubr.bf16.mxu0 0
  %301 = vmatmul.mubr.bf16.gmra.mrb[0].mxu0 %v245
  %v302 = vpop.f32.mrb[0].mxu0
  %v303 = vadd.f32 %v230, %v302
  %v304 = vpop.f32.mrb[0].mxu0
  %v305 = vpop.f32.mrb[0].mxu0
  %v306 = vadd.f32 %v230, %v305
  %v307 = vpop.f32.mrb[0].mxu0
  %308 = vmatprep.mubr.bf16.mxu0 0
  %309 = vmatmul.mubr.bf16.gmra.mrb[0].mxu0 %v248
  %v310 = vpop.f32.mrb[0].mxu0
  %v311 = vadd.f32 %v230, %v310
  %v312 = vpop.f32.mrb[0].mxu0
  %v313 = vpop.f32.mrb[0].mxu0
  %v314 = vadd.f32 %v230, %v313
  %v315 = vpop.f32.mrb[0].mxu0
  %316 = vmatprep.mubr.bf16.mxu0 0
  %317 = vmatmul.mubr.bf16.gmra.mrb[0].mxu0 %v251
  %v318 = vpop.f32.mrb[0].mxu0
  %v319 = vadd.f32 %v230, %v318
  %v320 = vpop.f32.mrb[0].mxu0
  %v321 = vpop.f32.mrb[0].mxu0
  %v322 = vadd.f32 %v230, %v321
  %v323 = vpop.f32.mrb[0].mxu0
  %324 = vmatprep.mubr.bf16.mxu0 0
  %325 = vmatmul.mubr.bf16.gmra.mrb[0].mxu0 %v254
  %v326 = vpop.f32.mrb[0].mxu0
  %v327 = vadd.f32 %v230, %v326
  %v328 = vpop.f32.mrb[0].mxu0
  %v329 = vpop.f32.mrb[0].mxu0
  %v330 = vadd.f32 %v230, %v329
  %v331 = vpop.f32.mrb[0].mxu0
  %332 = vmatprep.mubr.bf16.mxu0 0
  %333 = vmatmul.mubr.bf16.gmra.mrb[0].mxu0 %v257
  %v334 = vpop.f32.mrb[0].mxu0
  %v335 = vadd.f32 %v230, %v334
  %v336 = vpop.f32.mrb[0].mxu0
  %v337 = vpop.f32.mrb[0].mxu0
  %v338 = vadd.f32 %v230, %v337
  %v339 = vpop.f32.mrb[0].mxu0
  %340 = vmatprep.mubr.bf16.mxu0 0
  %341 = vmatmul.mubr.bf16.gmra.mrb[0].mxu0 %v260
  %v342 = vpop.f32.mrb[0].mxu0
  %v343 = vadd.f32 %v230, %v342
  %v344 = vpop.f32.mrb[0].mxu0
  %v345 = vpop.f32.mrb[0].mxu0
  %v346 = vadd.f32 %v230, %v345
  %v347 = vpop.f32.mrb[0].mxu0
  %348 = vmatprep.mubr.bf16.mxu0 0
  %349 = vmatmul.mubr.bf16.gmra.mrb[0].mxu0 %v263
  %v350 = vpop.f32.mrb[0].mxu0
  %v351 = vadd.f32 %v230, %v350
  %v352 = vpop.f32.mrb[0].mxu0
  %v353 = vpop.f32.mrb[0].mxu0
  %v354 = vadd.f32 %v230, %v353
  %v355 = vpop.f32.mrb[0].mxu0
  %356 = vmatprep.mubr.bf16.mxu0 0
  %357 = vmatmul.mubr.bf16.gmra.mrb[0].mxu0 %v266
  %v358 = vpop.f32.mrb[0].mxu0
  %v359 = vadd.f32 %v230, %v358
  %v360 = vpop.f32.mrb[0].mxu0
  %v361 = vpop.f32.mrb[0].mxu0
  %v362 = vadd.f32 %v230, %v361
  %v363 = vpop.f32.mrb[0].mxu0
  %364 = vdwg.mxu0
  %v365 = vmax.f32 %v303, 0.0
  %v366 = vmax.f32 %v306, 0.0
  %v367 = vmax.f32 %v311, 0.0
  %v368 = vmax.f32 %v314, 0.0
  %v369 = vmax.f32 %v319, 0.0
  %v370 = vmax.f32 %v322, 0.0
  %v371 = vmax.f32 %v327, 0.0
  %v372 = vmax.f32 %v330, 0.0
  %v373 = vmax.f32 %v335, 0.0
  %v374 = vmax.f32 %v338, 0.0
  %v375 = vmax.f32 %v343, 0.0
  %v376 = vmax.f32 %v346, 0.0
  %v377 = vmax.f32 %v351, 0.0
  %v378 = vmax.f32 %v354, 0.0
  %v379 = vmax.f32 %v359, 0.0
  %v380 = vmax.f32 %v362, 0.0
  %v381 = vld [vmem:[%s5] sm:$0xf]
  %s382 = sld [smem:[#allocation2]]
  %v383 = vpack.c.bf16 %v366, %v365
  %v384 = vpack.c.bf16 %v368, %v367
  %v385 = vpack.c.bf16 %v370, %v369
  %v386 = vpack.c.bf16 %v372, %v371
  %v387 = vpack.c.bf16 %v374, %v373
  %v388 = vpack.c.bf16 %v376, %v375
  %v389 = vpack.c.bf16 %v378, %v377
  %v390 = vpack.c.bf16 %v380, %v379
  %391 = vmatprep.subr.bf16.mxu0 0
  %392 = vmatpush1.bf16.xpose.msra.mxu0 %v383
  %393 = vmatprep.subr.bf16.mxu0 0
  %394 = vmatpush1.bf16.xpose.msra.mxu0 %v384
  %395 = vmatprep.subr.bf16.mxu0 0
  %396 = vmatpush1.bf16.xpose.msra.mxu0 %v385
  %397 = vmatprep.subr.bf16.mxu0 0
  %398 = vmatpush1.bf16.xpose.msra.mxu0 %v386
  %399 = vmatprep.subr.bf16.mxu0 0
  %400 = vmatpush1.bf16.xpose.msra.mxu0 %v387
  %401 = vmatprep.subr.bf16.mxu0 0
  %402 = vmatpush1.bf16.xpose.msra.mxu0 %v388
  %403 = vmatprep.subr.bf16.mxu0 0
  %404 = vmatpush1.bf16.xpose.msra.mxu0 %v389
  %405 = vmatprep.subr.bf16.mxu0 0
  %406 = vmatpush1.bf16.xpose.msra.mxu0 %v390
  %407 = vmatprep.subr.bf16.mxu0 0
  %408 = vmatpush1.bf16.xpose.msra.mxu0 0
  %409 = vmatprep.subr.bf16.mxu0 0
  %410 = vmatpush1.bf16.xpose.msra.mxu0 0
  %411 = vmatprep.subr.bf16.mxu0 0
  %412 = vmatpush1.bf16.xpose.msra.mxu0 0
  %413 = vmatprep.subr.bf16.mxu0 0
  %414 = vmatpush1.bf16.xpose.msra.mxu0 0
  %415 = vmatprep.subr.bf16.mxu0 0
  %416 = vmatpush1.bf16.xpose.msra.mxu0 0
  %417 = vmatprep.subr.bf16.mxu0 0
  %418 = vmatpush1.bf16.xpose.msra.mxu0 0
  %419 = vmatprep.subr.bf16.mxu0 0
  %420 = vmatpush1.bf16.xpose.msra.mxu0 0
  %421 = vmatprep.subr.bf16.mxu0 0
  %422 = vmatpush1.bf16.xpose.msra.mxu0 0
  %423 = vmatprep.mubr.bf16.mxu0 0
  %424 = vmatmul.mubr.bf16.gmra.mrb[0].mxu0 %v381
  %v425 = vpop.f32.mrb[0].mxu0
  %v426 = vadd.f32 0.0, %v425
  %v427 = vpop.f32.mrb[0].mxu0
  %v428 = vpop.f32.mrb[0].mxu0
  %v429 = vpop.f32.mrb[0].mxu0
  %430 = vdwg.mxu0
  %v431 = vstv %s382
  %v432 = vadd.f32 %v426, %v431
  %433 = vst [vmem:[%s7] sm:$0x1] %v432
  // Predicated region
  $region30: #{baseline_forward.1} parent=0 // pred_check
    _
  $region31: #{baseline_forward.1} parent=0 // pred_check_branch
    %435 = sbr.rel (0) target = $region33
  $region32: #{baseline_forward.1} parent=0 // pred_region
    _
  $region33: #{baseline_forward.1} parent=0 // pred_fallthru
    _
  // Predicated region
  $region34: #{baseline_forward.1} parent=0 // pred_check
    _
  $region35: #{baseline_forward.1} parent=0 // pred_check_branch
    %437 = sbr.rel (0) target = $region37
  $region36: #{baseline_forward.1} parent=0 // pred_region
    _
  $region37: #{baseline_forward.1} parent=0 // pred_fallthru
    _

</llo_original>
